<compile_context>
chip_gen: v5e
topology: v5e:2x2
jax: 0.10.0
libtpu: 0.0.40
codegen_flags: <defaults>
</compile_context>

<pallas_src>
import jax
import jax.numpy as jnp
from jax import lax
from jax.experimental import pallas as pl
from jax.experimental.pallas import tpu as pltpu


def _gemv_kernel(bias_ref, x_ref, w_ref, out_ref):
    # x_ref:    (TILE_N, D) VMEM   -- one tile of samples (streamed)
    # w_ref:    (1, D)      VMEM   -- folded weight row (resident, same block)
    # bias_ref: (1,)        SMEM   -- folded bias scalar
    # out_ref:  (1, 1, TILE_N) VMEM -- lane-dense: samples on the 128-wide lane axis
    y = lax.dot_general(
        w_ref[...], x_ref[...],
        dimension_numbers=(((1,), (1,)), ((), ())),
        preferred_element_type=jnp.float32,
    )                                      # (1, TILE_N)
    out_ref[...] = (y + bias_ref[0])[None, :, :]


def linear_regressor_forward(x, pca_mean, pca_components, w, *,
                             tile_n=None, force_pallas=False):
    """x: (N, D); pca_mean: (D,); pca_components: (K, D); w: (K+1, 1) -> (N, 1) f32."""
    N, D = x.shape
    K = pca_components.shape[0]

    xf = x.astype(jnp.float32)
    comp = pca_components.astype(jnp.float32)                  # (K, D)
    w_k = w[:K].astype(jnp.float32)                            # (K, 1)
    bias = w[K:, 0].astype(jnp.float32)                        # (1,)

    # Fold PCA projection + regression weights into a single affine map.
    w_eff = w_k.T @ comp                                       # (1, D)
    bias_eff = bias - jnp.dot(pca_mean.astype(jnp.float32), w_eff[0])   # (1,)

    # Small-problem fallback: pallas_call setup cost dominates tiny inputs.
    if not force_pallas and N * D * 4 < (2 << 20):
        return (xf @ w_eff.T + bias_eff).reshape(N, 1)

    # Row tile: multiple of 128 (lane-dense output), auto-sized to ~4 MiB of x
    # per buffer so double-buffering fits every generation's scoped-VMEM default.
    row_bytes = D * 4
    if tile_n is None:
        tile_n = (4 << 20) // row_bytes
    tile_n = max(128, (tile_n // 128) * 128)
    tile_n = min(tile_n, max(128, pl.cdiv(N, 128) * 128))
    tile_n = max(128, (tile_n // 128) * 128)
    num_tiles = pl.cdiv(N, tile_n)
    # Give the "parallel" grid axis >=2 steps (megacore / v7x dual-TC) when
    # there is enough work to split.
    if num_tiles == 1 and N > 256:
        tile_n = max(128, pl.cdiv(pl.cdiv(N, 2), 128) * 128)
        num_tiles = pl.cdiv(N, tile_n)

    out = pl.pallas_call(
        _gemv_kernel,
        out_shape=jax.ShapeDtypeStruct((num_tiles, 1, tile_n), jnp.float32),
        grid=(num_tiles,),
        in_specs=[
            pl.BlockSpec(memory_space=pltpu.SMEM),              # bias_eff (1,)
            pl.BlockSpec((tile_n, D), lambda i: (i, 0)),        # x tile (streamed, ragged last)
            pl.BlockSpec((1, D), lambda i: (0, 0)),             # w_eff (resident)
        ],
        out_specs=pl.BlockSpec((1, 1, tile_n), lambda i: (i, 0, 0)),
        compiler_params=pltpu.CompilerParams(
            dimension_semantics=("parallel",),
        ),
        cost_estimate=pl.CostEstimate(
            flops=2 * N * D,
            transcendentals=0,
            bytes_accessed=N * D * 4 + N * 4 + D * 4,
        ),
    )(bias_eff, xf, w_eff)

    # Lane-dense slab -> (N, 1); drops the over-hang lanes of the last tile.
    return out.reshape(num_tiles * tile_n)[:N].reshape(N, 1)


if __name__ == "__main__":
    # Small synthetic shapes consistent with the module: N samples, D engineered
    # features, K = num_components.  N is not a multiple of the tile so the
    # ragged last block + multi-tile grid path is exercised.
    N, D, K = 3000, 64, 8

    key = jax.random.PRNGKey(0)
    kx, kmean, kcomp, kw = jax.random.split(key, 4)

    x = jax.random.normal(kx, (N, D), dtype=jnp.float32)
    pca_mean = jax.random.normal(kmean, (D,), dtype=jnp.float32)
    pca_components = jax.random.normal(kcomp, (K, D), dtype=jnp.float32)
    w = jax.random.normal(kw, (K + 1, 1), dtype=jnp.float32)    # last row = bias (ones column)

    # Reference (plain JAX, unfused two-step path) of the same math.
    proj_ref = (x - pca_mean[None, :]) @ pca_components.T
    ref = jnp.concatenate([proj_ref, jnp.ones((N, 1), jnp.float32)], axis=1) @ w

    # Pallas path (forced; 3 grid steps of tile_n=1024, last block ragged).
    out = linear_regressor_forward(x, pca_mean, pca_components, w,
                                   tile_n=1024, force_pallas=True)
    out = jax.block_until_ready(out)
    assert out.shape == (N, 1)
    # Weight folding changes FP associativity vs the two-step matmul -> loose tol.
    assert jnp.allclose(out, ref, atol=2e-3, rtol=2e-3)

    # Small-problem fallback path (plain XLA) on a tiny slice.
    out_small = linear_regressor_forward(x[:300], pca_mean, pca_components, w)
    out_small = jax.block_until_ready(out_small)
    assert jnp.allclose(out_small, ref[:300], atol=2e-3, rtol=2e-3)

    print("KERNEL_OK")
</pallas_src>

<mosaic_0001>
module attributes {stable_mosaic.version = 11 : i64} {
  func.func @_gemv_kernel(%arg0: i32, %arg1: memref<1xf32, #tpu.memory_space<smem>>, %arg2: memref<1024x64xf32, #tpu.memory_space<vmem>>, %arg3: memref<1x64xf32, #tpu.memory_space<vmem>>, %arg4: memref<1x1x1024xf32, #tpu.memory_space<vmem>>) attributes {dimension_semantics = [#tpu.dimension_semantics<parallel>], iteration_bounds = array<i64: 3>, scalar_prefetch = 0 : i64, scratch_operands = 0 : i64, tpu.core_type = #tpu.core_type<tc>, window_params = [{transform_indices = @transform_0, window_bounds = array<i64: 1>}, {transform_indices = @transform_1, window_bounds = array<i64: 1024, 64>}, {pipeline_mode = #tpu.pipeline_mode<synchronous>, transform_indices = @transform_2, window_bounds = array<i64: 1, 64>}, {transform_indices = @transform_3, window_bounds = array<i64: 1, 1, 1024>}]} {
    %c0 = arith.constant 0 : index
    %c0_0 = arith.constant 0 : index
    %0 = vector.load %arg3[%c0, %c0_0] : memref<1x64xf32, #tpu.memory_space<vmem>>, vector<1x64xf32>
    %c0_1 = arith.constant 0 : index
    %c0_2 = arith.constant 0 : index
    %1 = vector.load %arg2[%c0_1, %c0_2] : memref<1024x64xf32, #tpu.memory_space<vmem>>, vector<1024x64xf32>
    %cst = arith.constant dense<0.000000e+00> : vector<1x1024xf32>
    %2 = tpu.matmul %0, %1, %cst {dimension_numbers = #tpu.dot_dimension_numbers<[1], [1], [0], [0], [0, 0, 1, 0], [], []>} : vector<1x64xf32>, vector<1024x64xf32>, vector<1x1024xf32> -> vector<1x1024xf32>
    %c0_3 = arith.constant 0 : index
    %3 = memref.load %arg1[%c0_3] : memref<1xf32, #tpu.memory_space<smem>>
    %4 = vector.broadcast %3 : f32 to vector<1x1024xf32>
    %5 = arith.addf %2, %4 : vector<1x1024xf32>
    %6 = vector.shape_cast %5 : vector<1x1024xf32> to vector<1x1x1024xf32>
    %c0_4 = arith.constant 0 : index
    %c0_5 = arith.constant 0 : index
    %c0_6 = arith.constant 0 : index
    %7 = vector.load %arg4[%c0_4, %c0_5, %c0_6] : memref<1x1x1024xf32, #tpu.memory_space<vmem>>, vector<1x1x1024xf32>
    tpu.vector_store %arg4[%c0_4, %c0_5, %c0_6], %6 {strides = array<i32>} : memref<1x1x1024xf32, #tpu.memory_space<vmem>>, vector<1x1x1024xf32>,
    return
  }
  func.func @transform_0(%arg0: i32) -> i32 {
    %c0_i32 = arith.constant 0 : i32
    %c0_i32_0 = arith.constant 0 : i32
    return %c0_i32 : i32
  }
  func.func @transform_1(%arg0: i32) -> (i32, i32) {
    %c0_i32 = arith.constant 0 : i32
    %c0_i32_0 = arith.constant 0 : i32
    return %arg0, %c0_i32 : i32, i32
  }
  func.func @transform_2(%arg0: i32) -> (i32, i32) {
    %c0_i32 = arith.constant 0 : i32
    %c0_i32_0 = arith.constant 0 : i32
    %c0_i32_1 = arith.constant 0 : i32
    return %c0_i32, %c0_i32_0 : i32, i32
  }
  func.func @transform_3(%arg0: i32) -> (i32, i32, i32) {
    %c0_i32 = arith.constant 0 : i32
    %c0_i32_0 = arith.constant 0 : i32
    %c0_i32_1 = arith.constant 0 : i32
    return %arg0, %c0_i32, %c0_i32_0 : i32, i32, i32
  }
}

</mosaic_0001>

<llo_original>
// kernel: tpu_custom_call.1
$region0: #{tpu_custom_call.1}
  #allocation0 [shape = 'u32[]', space=smem, size = 0x4, offset = 0x4, fixed_abs, tag = 'smem constant byte address 0x4 - core index']
  #allocation1 [shape = 'u32[72,128]{1,0:T(1,128)}', space=vmem, size = 0x9000, scoped, tag = 'internal scratch']
  #allocation2 [shape = 'f32[1]{0:T(128)S(6)}', space=smem, size = 0x200, scoped, tag = 'scoped memory for tpu_custom_call.1']
  %s0 = inlined_call_operand.<no memory space> [shape: f32[1], index: 0, kind: input, shape index: {}]
  %s1 = inlined_call_operand.vmem [shape: f32[3000,64], index: 1, kind: input, shape index: {}]
  %s2 = inlined_call_operand.vmem [shape: f32[1,64], index: 2, kind: input, shape index: {}]
  %s3 = inlined_call_operand.hbm [shape: f32[3,1,1024], index: 3, kind: output, shape index: {}]
  %s4 = sld [smem:[#allocation0]]
  $region45: #{tpu_custom_call.1} parent=0
    _
  %s6 = ssub.s32 1, %s4
  %s7 = scalar_select 0, %s6, %s4
  %8 = sst [smem:[#allocation2]] %s0
  $region1: #{tpu_custom_call.1} parent=0
    #allocation3 [shape = 'u8[8192]{0}', space=vmem, size = 0x2000, scoped, tag = 'output window, operand 0']
    #allocation4 [shape = 's32[2]{0}', space=sflag, size = 0x8, scoped, tag = 'scoped memory for tpu_custom_call.1']
    %9 = vsyncpa [#allocation4], 0
    %s10 = scalar_lea.sflag [#allocation4], 1
    %11 = vsyncpa %s10, 0
    loop: start=0, step=1, limit=5
    $region2: #{tpu_custom_call.1} parent=1 // loop_pre_header
      _
    $region3: #{tpu_custom_call.1} parent=1 // loop_header
      %s13 = sphi 0, %s17
      %p14 = scmp.ge.s32.totalorder %s13, 5
      %s21 = sphi 0, %s21
      %s23 = sphi 0, %s21
      %s24 = sphi 0, %s23
      %s38 = sphi 0, %s24
      %s44 = sphi 0, %s46
      %s47 = sphi 0, %s44
      %s48 = sphi 0, %s47
      %s64 = sphi 0, %s48
      %s68 = sphi 0, %s68
      %s70 = sphi 0, %s68
      %s71 = sphi 0, %s70
      %s85 = sphi 0, %s71
      %s91 = sphi 0, %s93
      %s94 = sphi 0, %s91
      %s95 = sphi 0, %s94
      %s111 = sphi 0, %s95
    $region4: #{tpu_custom_call.1} parent=1 // loop_header_branch
      %16 = sbr.rel (%p14) target = $region8
    $region5: #{tpu_custom_call.1} parent=1 // loop_body
      %s18 = ssub.s32 %s13, 1
      %s19 = ssub.s32 %s13, 2
      %s20 = sadd.s32 %s13, 1
      %s22 = sadd.s32 %s21, 1
      %p25 = scmp.eq.s32.totalorder %s13, 2
      %p26 = scmp.ne.s32.totalorder %s21, %s23
      %p27 = scmp.eq.s32.totalorder %s13, 0
      %p28 = por %p26, %p27
      %p29 = scmp.ne.s32.totalorder %s21, %s23
      %p30 = scmp.eq.s32.totalorder %s18, 2
      %p31 = por %p29, %p30
      %p32 = scmp.ne.s32.totalorder %s23, %s24
      %p33 = scmp.eq.s32.totalorder %s18, 0
      %p34 = por %p32, %p33
      %p35 = scmp.ne.s32.totalorder %s23, %s24
      %p36 = scmp.eq.s32.totalorder %s19, 2
      %p37 = por %p35, %p36
      %p39 = scmp.ne.s32.totalorder %s24, %s38
      %p40 = scmp.eq.s32.totalorder %s19, 0
      %p41 = por %p39, %p40
      %s42 = ssub.s32 %s13, %s20
      %p43 = scmp.eq.s32.totalorder %s42, 0
      %s45 = sadd.s32 %s44, 1
      %s46 = scalar_select %p43, %s44, %s45
      %p49 = pneg %p43
      %p50 = scmp.eq.s32.totalorder %s13, 2
      %p51 = por %p49, %p50
      %p52 = scmp.ne.s32.totalorder %s44, %s47
      %p53 = scmp.eq.s32.totalorder %s13, 0
      %p54 = por %p52, %p53
      %p55 = scmp.ne.s32.totalorder %s44, %s47
      %p56 = scmp.eq.s32.totalorder %s18, 2
      %p57 = por %p55, %p56
      %p58 = scmp.ne.s32.totalorder %s47, %s48
      %p59 = scmp.eq.s32.totalorder %s18, 0
      %p60 = por %p58, %p59
      %p61 = scmp.ne.s32.totalorder %s47, %s48
      %p62 = scmp.eq.s32.totalorder %s19, 2
      %p63 = por %p61, %p62
      %p65 = scmp.ne.s32.totalorder %s48, %s64
      %p66 = scmp.eq.s32.totalorder %s19, 0
      %p67 = por %p65, %p66
      %s69 = sadd.s32 %s68, 1
      %p72 = scmp.eq.s32.totalorder %s13, 2
      %p73 = scmp.ne.s32.totalorder %s68, %s70
      %p74 = scmp.eq.s32.totalorder %s13, 0
      %p75 = por %p73, %p74
      %p76 = scmp.ne.s32.totalorder %s68, %s70
      %p77 = scmp.eq.s32.totalorder %s18, 2
      %p78 = por %p76, %p77
      %p79 = scmp.ne.s32.totalorder %s70, %s71
      %p80 = scmp.eq.s32.totalorder %s18, 0
      %p81 = por %p79, %p80
      %p82 = scmp.ne.s32.totalorder %s70, %s71
      %p83 = scmp.eq.s32.totalorder %s19, 2
      %p84 = por %p82, %p83
      %p86 = scmp.ne.s32.totalorder %s71, %s85
      %p87 = scmp.eq.s32.totalorder %s19, 0
      %p88 = por %p86, %p87
      %s89 = ssub.s32 %s13, %s20
      %p90 = scmp.eq.s32.totalorder %s89, 0
      %s92 = sadd.s32 %s91, 1
      %s93 = scalar_select %p90, %s91, %s92
      %p96 = pneg %p90
      %p97 = scmp.eq.s32.totalorder %s13, 2
      %p98 = por %p96, %p97
      %p99 = scmp.ne.s32.totalorder %s91, %s94
      %p100 = scmp.eq.s32.totalorder %s13, 0
      %p101 = por %p99, %p100
      %p102 = scmp.ne.s32.totalorder %s91, %s94
      %p103 = scmp.eq.s32.totalorder %s18, 2
      %p104 = por %p102, %p103
      %p105 = scmp.ne.s32.totalorder %s94, %s95
      %p106 = scmp.eq.s32.totalorder %s18, 0
      %p107 = por %p105, %p106
      %p108 = scmp.ne.s32.totalorder %s94, %s95
      %p109 = scmp.eq.s32.totalorder %s19, 2
      %p110 = por %p108, %p109
      %p112 = scmp.ne.s32.totalorder %s95, %s111
      %p113 = scmp.eq.s32.totalorder %s19, 0
      %p114 = por %p112, %p113
      %p115 = scmp.le.s32.totalorder 1, %s13
      %p116 = scmp.lt.s32.totalorder %s13, 4
      %p117 = pnand %p115, %p116
      %p118 = pneg %p117
      // Predicated region
      $region9: #{tpu_custom_call.1} parent=5 // pred_check
        _
      $region10: #{tpu_custom_call.1} parent=5 // pred_check_branch
        %120 = sbr.rel (%p117) target = $region12
      $region11: #{tpu_custom_call.1} parent=5 // pred_region
        %s121 = ssub.s32 %s13, 1
        // Predicated region
        $region13: #{tpu_custom_call.1} parent=11 // pred_check
          %p122 = pneg %p34
        $region14: #{tpu_custom_call.1} parent=11 // pred_check_branch
          %124 = sbr.rel (%p122) target = $region16
        $region15: #{tpu_custom_call.1} parent=11 // pred_region
          _
        $region16: #{tpu_custom_call.1} parent=11 // pred_fallthru
          _
        // Predicated region
        $region17: #{tpu_custom_call.1} parent=11 // pred_check
          %p125 = pneg %p81
        $region18: #{tpu_custom_call.1} parent=11 // pred_check_branch
          %127 = sbr.rel (%p125) target = $region20
        $region19: #{tpu_custom_call.1} parent=11 // pred_region
          _
        $region20: #{tpu_custom_call.1} parent=11 // pred_fallthru
          _
      $region12: #{tpu_custom_call.1} parent=5 // pred_fallthru
        _
      %p128 = scmp.lt.s32.totalorder %s13, 3
      // Predicated region
      $region21: #{tpu_custom_call.1} parent=5 // pred_check
        %p129 = pneg %p128
      $region22: #{tpu_custom_call.1} parent=5 // pred_check_branch
        %131 = sbr.rel (%p129) target = $region24
      $region23: #{tpu_custom_call.1} parent=5 // pred_region
        // Predicated region
        $region25: #{tpu_custom_call.1} parent=23 // pred_check
          %p132 = pneg %p54
        $region26: #{tpu_custom_call.1} parent=23 // pred_check_branch
          %134 = sbr.rel (%p132) target = $region28
        $region27: #{tpu_custom_call.1} parent=23 // pred_region
          %s135 = smul.u32 128, %s13
          %s136 = ssub.s32 375, %s135
          %p137 = scmp.lt.s32.totalorder %s136, 128
          %s138 = scalar_select %p137, %s136, 128
          %s139 = smul.u32 8, %s138
          %p140 = scmp.lt.s32.totalorder %s135, 374
          %s141 = scalar_select %p140, %s135, 374
          %s142 = smul.addr %s141, 8
          %s143 = scalar_lea.vmem %s1, %s142
          %s144 = smul.u32 128, %s13
          %s145 = ssub.s32 375, %s144
          %p146 = scmp.lt.s32.totalorder %s145, 128
          %s147 = scalar_select %p146, %s145, 128
          %s148 = smul.u32 8, %s147
        $region28: #{tpu_custom_call.1} parent=23 // pred_fallthru
          _
      $region24: #{tpu_custom_call.1} parent=5 // pred_fallthru
        _
      %p149 = scmp.le.s32.totalorder 1, %s13
      %p150 = scmp.lt.s32.totalorder %s13, 4
      %p151 = pnand %p149, %p150
      %p152 = pneg %p151
      // Predicated region
      $region29: #{tpu_custom_call.1} parent=5 // pred_check
        _
      $region30: #{tpu_custom_call.1} parent=5 // pred_check_branch
        %154 = sbr.rel (%p151) target = $region32
      $region31: #{tpu_custom_call.1} parent=5 // pred_region
        %s155 = ssub.s32 %s13, 1
        %p156 = pneg %p34
        %p157 = pneg %p31
        %s158 = smul.u32 128, %s18
        %s159 = ssub.s32 375, %s158
        %p160 = scmp.lt.s32.totalorder %s159, 128
        %s161 = scalar_select %p160, %s159, 128
        %s162 = smul.u32 8, %s161
        %p163 = scmp.lt.s32.totalorder %s158, 374
        %s164 = scalar_select %p163, %s158, 374
        %s165 = smul.addr %s164, 8
        %s166 = scalar_lea.vmem %s1, %s165
        %p167 = pneg %p60
        %p168 = pneg %p57
        %p169 = pneg %p81
        %p170 = pneg %p78
        %p171 = pneg %p107
        %p172 = pneg %p104
        %s173 = sand.u32 %s94, 1
        %s174 = scalar_lea.sflag [#allocation4], %s173
        %s175 = sand.u32 %s94, 1
        %s176 = smul.addr %s175, 8
        %s177 = scalar_lea.vmem [#allocation3], %s176
        %s178 = smul.u32 128, %s18
        %s179 = ssub.s32 375, %s178
        %p180 = scmp.lt.s32.totalorder %s179, 128
        %s181 = scalar_select %p180, %s179, 128
        %s182 = smul.u32 8, %s181
        %p183 = scmp.lt.s32.totalorder %s178, 374
        %s184 = scalar_select %p183, %s178, 374
        %s185 = smul.addr %s184, 8
        %s186 = scalar_lea.vmem %s1, %s185
        %s187 = smul.u32 128, %s18
        %s188 = ssub.s32 375, %s187
        %p189 = scmp.lt.s32.totalorder %s188, 128
        %s190 = scalar_select %p189, %s188, 128
        %s191 = smul.u32 8, %s190
        %v192 = vld [vmem:[%s2] sm:$0x1]
        %v193 = vld [vmem:[%s186] sm:$0xff]
        %v194 = vld [vmem:[%s186 + $0x8] sm:$0xff]
        %v195 = vld [vmem:[%s186 + $0x10] sm:$0xff]
        %v196 = vld [vmem:[%s186 + $0x18] sm:$0xff]
        %v197 = vld [vmem:[%s186 + $0x20] sm:$0xff]
        %v198 = vld [vmem:[%s186 + $0x28] sm:$0xff]
        %v199 = vld [vmem:[%s186 + $0x30] sm:$0xff]
        %v200 = vld [vmem:[%s186 + $0x38] sm:$0xff]
        %v201 = vld [vmem:[%s186 + $0x40] sm:$0xff]
        %v202 = vld [vmem:[%s186 + $0x48] sm:$0xff]
        %v203 = vld [vmem:[%s186 + $0x50] sm:$0xff]
        %v204 = vld [vmem:[%s186 + $0x58] sm:$0xff]
        %v205 = vld [vmem:[%s186 + $0x60] sm:$0xff]
        %v206 = vld [vmem:[%s186 + $0x68] sm:$0xff]
        %v207 = vld [vmem:[%s186 + $0x70] sm:$0xff]
        %v208 = vld [vmem:[%s186 + $0x78] sm:$0xff]
        %v209 = vld [vmem:[%s186 + $0x80] sm:$0xff]
        %v210 = vld [vmem:[%s186 + $0x88] sm:$0xff]
        %v211 = vld [vmem:[%s186 + $0x90] sm:$0xff]
        %v212 = vld [vmem:[%s186 + $0x98] sm:$0xff]
        %v213 = vld [vmem:[%s186 + $0xa0] sm:$0xff]
        %v214 = vld [vmem:[%s186 + $0xa8] sm:$0xff]
        %v215 = vld [vmem:[%s186 + $0xb0] sm:$0xff]
        %v216 = vld [vmem:[%s186 + $0xb8] sm:$0xff]
        %v217 = vld [vmem:[%s186 + $0xc0] sm:$0xff]
        %v218 = vld [vmem:[%s186 + $0xc8] sm:$0xff]
        %v219 = vld [vmem:[%s186 + $0xd0] sm:$0xff]
        %v220 = vld [vmem:[%s186 + $0xd8] sm:$0xff]
        %v221 = vld [vmem:[%s186 + $0xe0] sm:$0xff]
        %v222 = vld [vmem:[%s186 + $0xe8] sm:$0xff]
        %v223 = vld [vmem:[%s186 + $0xf0] sm:$0xff]
        %v224 = vld [vmem:[%s186 + $0xf8] sm:$0xff]
        %v225 = vld [vmem:[%s186 + $0x100] sm:$0xff]
        %v226 = vld [vmem:[%s186 + $0x108] sm:$0xff]
        %v227 = vld [vmem:[%s186 + $0x110] sm:$0xff]
        %v228 = vld [vmem:[%s186 + $0x118] sm:$0xff]
        %v229 = vld [vmem:[%s186 + $0x120] sm:$0xff]
        %v230 = vld [vmem:[%s186 + $0x128] sm:$0xff]
        %v231 = vld [vmem:[%s186 + $0x130] sm:$0xff]
        %v232 = vld [vmem:[%s186 + $0x138] sm:$0xff]
        %v233 = vld [vmem:[%s186 + $0x140] sm:$0xff]
        %v234 = vld [vmem:[%s186 + $0x148] sm:$0xff]
        %v235 = vld [vmem:[%s186 + $0x150] sm:$0xff]
        %v236 = vld [vmem:[%s186 + $0x158] sm:$0xff]
        %v237 = vld [vmem:[%s186 + $0x160] sm:$0xff]
        %v238 = vld [vmem:[%s186 + $0x168] sm:$0xff]
        %v239 = vld [vmem:[%s186 + $0x170] sm:$0xff]
        %v240 = vld [vmem:[%s186 + $0x178] sm:$0xff]
        %v241 = vld [vmem:[%s186 + $0x180] sm:$0xff]
        %v242 = vld [vmem:[%s186 + $0x188] sm:$0xff]
        %v243 = vld [vmem:[%s186 + $0x190] sm:$0xff]
        %v244 = vld [vmem:[%s186 + $0x198] sm:$0xff]
        %v245 = vld [vmem:[%s186 + $0x1a0] sm:$0xff]
        %v246 = vld [vmem:[%s186 + $0x1a8] sm:$0xff]
        %v247 = vld [vmem:[%s186 + $0x1b0] sm:$0xff]
        %v248 = vld [vmem:[%s186 + $0x1b8] sm:$0xff]
        %v249 = vld [vmem:[%s186 + $0x1c0] sm:$0xff]
        %v250 = vld [vmem:[%s186 + $0x1c8] sm:$0xff]
        %v251 = vld [vmem:[%s186 + $0x1d0] sm:$0xff]
        %v252 = vld [vmem:[%s186 + $0x1d8] sm:$0xff]
        %v253 = vld [vmem:[%s186 + $0x1e0] sm:$0xff]
        %v254 = vld [vmem:[%s186 + $0x1e8] sm:$0xff]
        %v255 = vld [vmem:[%s186 + $0x1f0] sm:$0xff]
        %v256 = vld [vmem:[%s186 + $0x1f8] sm:$0xff]
        %v257 = vld [vmem:[%s186 + $0x200] sm:$0xff]
        %v258 = vld [vmem:[%s186 + $0x208] sm:$0xff]
        %v259 = vld [vmem:[%s186 + $0x210] sm:$0xff]
        %v260 = vld [vmem:[%s186 + $0x218] sm:$0xff]
        %v261 = vld [vmem:[%s186 + $0x220] sm:$0xff]
        %v262 = vld [vmem:[%s186 + $0x228] sm:$0xff]
        %v263 = vld [vmem:[%s186 + $0x230] sm:$0xff]
        %v264 = vld [vmem:[%s186 + $0x238] sm:$0xff]
        %v265 = vld [vmem:[%s186 + $0x240] sm:$0xff]
        %v266 = vld [vmem:[%s186 + $0x248] sm:$0xff]
        %v267 = vld [vmem:[%s186 + $0x250] sm:$0xff]
        %v268 = vld [vmem:[%s186 + $0x258] sm:$0xff]
        %v269 = vld [vmem:[%s186 + $0x260] sm:$0xff]
        %v270 = vld [vmem:[%s186 + $0x268] sm:$0xff]
        %v271 = vld [vmem:[%s186 + $0x270] sm:$0xff]
        %v272 = vld [vmem:[%s186 + $0x278] sm:$0xff]
        %v273 = vld [vmem:[%s186 + $0x280] sm:$0xff]
        %v274 = vld [vmem:[%s186 + $0x288] sm:$0xff]
        %v275 = vld [vmem:[%s186 + $0x290] sm:$0xff]
        %v276 = vld [vmem:[%s186 + $0x298] sm:$0xff]
        %v277 = vld [vmem:[%s186 + $0x2a0] sm:$0xff]
        %v278 = vld [vmem:[%s186 + $0x2a8] sm:$0xff]
        %v279 = vld [vmem:[%s186 + $0x2b0] sm:$0xff]
        %v280 = vld [vmem:[%s186 + $0x2b8] sm:$0xff]
        %v281 = vld [vmem:[%s186 + $0x2c0] sm:$0xff]
        %v282 = vld [vmem:[%s186 + $0x2c8] sm:$0xff]
        %v283 = vld [vmem:[%s186 + $0x2d0] sm:$0xff]
        %v284 = vld [vmem:[%s186 + $0x2d8] sm:$0xff]
        %v285 = vld [vmem:[%s186 + $0x2e0] sm:$0xff]
        %v286 = vld [vmem:[%s186 + $0x2e8] sm:$0xff]
        %v287 = vld [vmem:[%s186 + $0x2f0] sm:$0xff]
        %v288 = vld [vmem:[%s186 + $0x2f8] sm:$0xff]
        %v289 = vld [vmem:[%s186 + $0x300] sm:$0xff]
        %v290 = vld [vmem:[%s186 + $0x308] sm:$0xff]
        %v291 = vld [vmem:[%s186 + $0x310] sm:$0xff]
        %v292 = vld [vmem:[%s186 + $0x318] sm:$0xff]
        %v293 = vld [vmem:[%s186 + $0x320] sm:$0xff]
        %v294 = vld [vmem:[%s186 + $0x328] sm:$0xff]
        %v295 = vld [vmem:[%s186 + $0x330] sm:$0xff]
        %v296 = vld [vmem:[%s186 + $0x338] sm:$0xff]
        %v297 = vld [vmem:[%s186 + $0x340] sm:$0xff]
        %v298 = vld [vmem:[%s186 + $0x348] sm:$0xff]
        %v299 = vld [vmem:[%s186 + $0x350] sm:$0xff]
        %v300 = vld [vmem:[%s186 + $0x358] sm:$0xff]
        %v301 = vld [vmem:[%s186 + $0x360] sm:$0xff]
        %v302 = vld [vmem:[%s186 + $0x368] sm:$0xff]
        %v303 = vld [vmem:[%s186 + $0x370] sm:$0xff]
        %v304 = vld [vmem:[%s186 + $0x378] sm:$0xff]
        %v305 = vld [vmem:[%s186 + $0x380] sm:$0xff]
        %v306 = vld [vmem:[%s186 + $0x388] sm:$0xff]
        %v307 = vld [vmem:[%s186 + $0x390] sm:$0xff]
        %v308 = vld [vmem:[%s186 + $0x398] sm:$0xff]
        %v309 = vld [vmem:[%s186 + $0x3a0] sm:$0xff]
        %v310 = vld [vmem:[%s186 + $0x3a8] sm:$0xff]
        %v311 = vld [vmem:[%s186 + $0x3b0] sm:$0xff]
        %v312 = vld [vmem:[%s186 + $0x3b8] sm:$0xff]
        %v313 = vld [vmem:[%s186 + $0x3c0] sm:$0xff]
        %v314 = vld [vmem:[%s186 + $0x3c8] sm:$0xff]
        %v315 = vld [vmem:[%s186 + $0x3d0] sm:$0xff]
        %v316 = vld [vmem:[%s186 + $0x3d8] sm:$0xff]
        %v317 = vld [vmem:[%s186 + $0x3e0] sm:$0xff]
        %v318 = vld [vmem:[%s186 + $0x3e8] sm:$0xff]
        %v319 = vld [vmem:[%s186 + $0x3f0] sm:$0xff]
        %v320 = vld [vmem:[%s186 + $0x3f8] sm:$0xff]
        %s321 = sld [smem:[#allocation2]]
        %v322 = vstv %s321
        %vm323 = vcmask 523264
        %v325 = vsel %vm323, %v192, 0
        %v328 = vsel %vm323, %v193, 0
        %v331 = vsel %vm323, %v194, 0
        %v334 = vsel %vm323, %v195, 0
        %v337 = vsel %vm323, %v196, 0
        %v340 = vsel %vm323, %v197, 0
        %v343 = vsel %vm323, %v198, 0
        %v346 = vsel %vm323, %v199, 0
        %v349 = vsel %vm323, %v200, 0
        %v352 = vsel %vm323, %v201, 0
        %v355 = vsel %vm323, %v202, 0
        %v358 = vsel %vm323, %v203, 0
        %v361 = vsel %vm323, %v204, 0
        %v364 = vsel %vm323, %v205, 0
        %v367 = vsel %vm323, %v206, 0
        %v370 = vsel %vm323, %v207, 0
        %v373 = vsel %vm323, %v208, 0
        %v376 = vsel %vm323, %v209, 0
        %v379 = vsel %vm323, %v210, 0
        %v382 = vsel %vm323, %v211, 0
        %v385 = vsel %vm323, %v212, 0
        %v388 = vsel %vm323, %v213, 0
        %v391 = vsel %vm323, %v214, 0
        %v394 = vsel %vm323, %v215, 0
        %v397 = vsel %vm323, %v216, 0
        %v400 = vsel %vm323, %v217, 0
        %v403 = vsel %vm323, %v218, 0
        %v406 = vsel %vm323, %v219, 0
        %v409 = vsel %vm323, %v220, 0
        %v412 = vsel %vm323, %v221, 0
        %v415 = vsel %vm323, %v222, 0
        %v418 = vsel %vm323, %v223, 0
        %v421 = vsel %vm323, %v224, 0
        %v424 = vsel %vm323, %v225, 0
        %v427 = vsel %vm323, %v226, 0
        %v430 = vsel %vm323, %v227, 0
        %v433 = vsel %vm323, %v228, 0
        %v436 = vsel %vm323, %v229, 0
        %v439 = vsel %vm323, %v230, 0
        %v442 = vsel %vm323, %v231, 0
        %v445 = vsel %vm323, %v232, 0
        %v448 = vsel %vm323, %v233, 0
        %v451 = vsel %vm323, %v234, 0
        %v454 = vsel %vm323, %v235, 0
        %v457 = vsel %vm323, %v236, 0
        %v460 = vsel %vm323, %v237, 0
        %v463 = vsel %vm323, %v238, 0
        %v466 = vsel %vm323, %v239, 0
        %v469 = vsel %vm323, %v240, 0
        %v472 = vsel %vm323, %v241, 0
        %v475 = vsel %vm323, %v242, 0
        %v478 = vsel %vm323, %v243, 0
        %v481 = vsel %vm323, %v244, 0
        %v484 = vsel %vm323, %v245, 0
        %v487 = vsel %vm323, %v246, 0
        %v490 = vsel %vm323, %v247, 0
        %v493 = vsel %vm323, %v248, 0
        %v496 = vsel %vm323, %v249, 0
        %v499 = vsel %vm323, %v250, 0
        %v502 = vsel %vm323, %v251, 0
        %v505 = vsel %vm323, %v252, 0
        %v508 = vsel %vm323, %v253, 0
        %v511 = vsel %vm323, %v254, 0
        %v514 = vsel %vm323, %v255, 0
        %v517 = vsel %vm323, %v256, 0
        %v520 = vsel %vm323, %v257, 0
        %v523 = vsel %vm323, %v258, 0
        %v526 = vsel %vm323, %v259, 0
        %v529 = vsel %vm323, %v260, 0
        %v532 = vsel %vm323, %v261, 0
        %v535 = vsel %vm323, %v262, 0
        %v538 = vsel %vm323, %v263, 0
        %v541 = vsel %vm323, %v264, 0
        %v544 = vsel %vm323, %v265, 0
        %v547 = vsel %vm323, %v266, 0
        %v550 = vsel %vm323, %v267, 0
        %v553 = vsel %vm323, %v268, 0
        %v556 = vsel %vm323, %v269, 0
        %v559 = vsel %vm323, %v270, 0
        %v562 = vsel %vm323, %v271, 0
        %v565 = vsel %vm323, %v272, 0
        %v568 = vsel %vm323, %v273, 0
        %v571 = vsel %vm323, %v274, 0
        %v574 = vsel %vm323, %v275, 0
        %v577 = vsel %vm323, %v276, 0
        %v580 = vsel %vm323, %v277, 0
        %v583 = vsel %vm323, %v278, 0
        %v586 = vsel %vm323, %v279, 0
        %v589 = vsel %vm323, %v280, 0
        %v592 = vsel %vm323, %v281, 0
        %v595 = vsel %vm323, %v282, 0
        %v598 = vsel %vm323, %v283, 0
        %v601 = vsel %vm323, %v284, 0
        %v604 = vsel %vm323, %v285, 0
        %v607 = vsel %vm323, %v286, 0
        %v610 = vsel %vm323, %v287, 0
        %v613 = vsel %vm323, %v288, 0
        %v616 = vsel %vm323, %v289, 0
        %v619 = vsel %vm323, %v290, 0
        %v622 = vsel %vm323, %v291, 0
        %v625 = vsel %vm323, %v292, 0
        %v628 = vsel %vm323, %v293, 0
        %v631 = vsel %vm323, %v294, 0
        %v634 = vsel %vm323, %v295, 0
        %v637 = vsel %vm323, %v296, 0
        %v640 = vsel %vm323, %v297, 0
        %v643 = vsel %vm323, %v298, 0
        %v646 = vsel %vm323, %v299, 0
        %v649 = vsel %vm323, %v300, 0
        %v652 = vsel %vm323, %v301, 0
        %v655 = vsel %vm323, %v302, 0
        %v658 = vsel %vm323, %v303, 0
        %v661 = vsel %vm323, %v304, 0
        %v664 = vsel %vm323, %v305, 0
        %v667 = vsel %vm323, %v306, 0
        %v670 = vsel %vm323, %v307, 0
        %v673 = vsel %vm323, %v308, 0
        %v676 = vsel %vm323, %v309, 0
        %v679 = vsel %vm323, %v310, 0
        %v682 = vsel %vm323, %v311, 0
        %v685 = vsel %vm323, %v312, 0
        %v688 = vsel %vm323, %v313, 0
        %v691 = vsel %vm323, %v314, 0
        %v694 = vsel %vm323, %v315, 0
        %v697 = vsel %vm323, %v316, 0
        %v700 = vsel %vm323, %v317, 0
        %v703 = vsel %vm323, %v318, 0
        %v706 = vsel %vm323, %v319, 0
        %v709 = vsel %vm323, %v320, 0
        %711 = vmatpush.xpose.msra.mxu0 %v373
        %712 = vmatpush.xpose.msra.mxu0 %v370
        %713 = vmatpush.xpose.msra.mxu0 %v367
        %714 = vmatpush.xpose.msra.mxu0 %v364
        %715 = vmatpush.xpose.msra.mxu0 %v361
        %716 = vmatpush.xpose.msra.mxu0 %v358
        %717 = vmatpush.xpose.msra.mxu0 %v355
        %718 = vmatpush.xpose.msra.mxu0 %v352
        %719 = vmatpush.xpose.msra.mxu0 %v349
        %720 = vmatpush.xpose.msra.mxu0 %v346
        %721 = vmatpush.xpose.msra.mxu0 %v343
        %722 = vmatpush.xpose.msra.mxu0 %v340
        %723 = vmatpush.xpose.msra.mxu0 %v337
        %724 = vmatpush.xpose.msra.mxu0 %v334
        %725 = vmatpush.xpose.msra.mxu0 %v331
        %726 = vmatpush.xpose.msra.mxu0 %v328
        %727 = vmatmul.f32.gmra.mxu0 %v325
        %v728 = vpop.f32.mrf.mxu0
        %v729 = vadd.f32 %v322, %v728
        %730 = vdwg.mxu0
        %731 = vmatpush.xpose.msra.mxu0 %v421
        %732 = vmatpush.xpose.msra.mxu0 %v418
        %733 = vmatpush.xpose.msra.mxu0 %v415
        %734 = vmatpush.xpose.msra.mxu0 %v412
        %735 = vmatpush.xpose.msra.mxu0 %v409
        %736 = vmatpush.xpose.msra.mxu0 %v406
        %737 = vmatpush.xpose.msra.mxu0 %v403
        %738 = vmatpush.xpose.msra.mxu0 %v400
        %739 = vmatpush.xpose.msra.mxu0 %v397
        %740 = vmatpush.xpose.msra.mxu0 %v394
        %741 = vmatpush.xpose.msra.mxu0 %v391
        %742 = vmatpush.xpose.msra.mxu0 %v388
        %743 = vmatpush.xpose.msra.mxu0 %v385
        %744 = vmatpush.xpose.msra.mxu0 %v382
        %745 = vmatpush.xpose.msra.mxu0 %v379
        %746 = vmatpush.xpose.msra.mxu0 %v376
        %747 = vmatmul.f32.gmra.mxu0 %v325
        %v748 = vpop.f32.mrf.mxu0
        %v749 = vadd.f32 %v322, %v748
        %750 = vdwg.mxu0
        %751 = vmatpush.xpose.msra.mxu0 %v469
        %752 = vmatpush.xpose.msra.mxu0 %v466
        %753 = vmatpush.xpose.msra.mxu0 %v463
        %754 = vmatpush.xpose.msra.mxu0 %v460
        %755 = vmatpush.xpose.msra.mxu0 %v457
        %756 = vmatpush.xpose.msra.mxu0 %v454
        %757 = vmatpush.xpose.msra.mxu0 %v451
        %758 = vmatpush.xpose.msra.mxu0 %v448
        %759 = vmatpush.xpose.msra.mxu0 %v445
        %760 = vmatpush.xpose.msra.mxu0 %v442
        %761 = vmatpush.xpose.msra.mxu0 %v439
        %762 = vmatpush.xpose.msra.mxu0 %v436
        %763 = vmatpush.xpose.msra.mxu0 %v433
        %764 = vmatpush.xpose.msra.mxu0 %v430
        %765 = vmatpush.xpose.msra.mxu0 %v427
        %766 = vmatpush.xpose.msra.mxu0 %v424
        %767 = vmatmul.f32.gmra.mxu0 %v325
        %v768 = vpop.f32.mrf.mxu0
        %v769 = vadd.f32 %v322, %v768
        %770 = vdwg.mxu0
        %771 = vmatpush.xpose.msra.mxu0 %v517
        %772 = vmatpush.xpose.msra.mxu0 %v514
        %773 = vmatpush.xpose.msra.mxu0 %v511
        %774 = vmatpush.xpose.msra.mxu0 %v508
        %775 = vmatpush.xpose.msra.mxu0 %v505
        %776 = vmatpush.xpose.msra.mxu0 %v502
        %777 = vmatpush.xpose.msra.mxu0 %v499
        %778 = vmatpush.xpose.msra.mxu0 %v496
        %779 = vmatpush.xpose.msra.mxu0 %v493
        %780 = vmatpush.xpose.msra.mxu0 %v490
        %781 = vmatpush.xpose.msra.mxu0 %v487
        %782 = vmatpush.xpose.msra.mxu0 %v484
        %783 = vmatpush.xpose.msra.mxu0 %v481
        %784 = vmatpush.xpose.msra.mxu0 %v478
        %785 = vmatpush.xpose.msra.mxu0 %v475
        %786 = vmatpush.xpose.msra.mxu0 %v472
        %787 = vmatmul.f32.gmra.mxu0 %v325
        %v788 = vpop.f32.mrf.mxu0
        %v789 = vadd.f32 %v322, %v788
        %790 = vdwg.mxu0
        %791 = vmatpush.xpose.msra.mxu0 %v565
        %792 = vmatpush.xpose.msra.mxu0 %v562
        %793 = vmatpush.xpose.msra.mxu0 %v559
        %794 = vmatpush.xpose.msra.mxu0 %v556
        %795 = vmatpush.xpose.msra.mxu0 %v553
        %796 = vmatpush.xpose.msra.mxu0 %v550
        %797 = vmatpush.xpose.msra.mxu0 %v547
        %798 = vmatpush.xpose.msra.mxu0 %v544
        %799 = vmatpush.xpose.msra.mxu0 %v541
        %800 = vmatpush.xpose.msra.mxu0 %v538
        %801 = vmatpush.xpose.msra.mxu0 %v535
        %802 = vmatpush.xpose.msra.mxu0 %v532
        %803 = vmatpush.xpose.msra.mxu0 %v529
        %804 = vmatpush.xpose.msra.mxu0 %v526
        %805 = vmatpush.xpose.msra.mxu0 %v523
        %806 = vmatpush.xpose.msra.mxu0 %v520
        %807 = vmatmul.f32.gmra.mxu0 %v325
        %v808 = vpop.f32.mrf.mxu0
        %v809 = vadd.f32 %v322, %v808
        %810 = vdwg.mxu0
        %811 = vmatpush.xpose.msra.mxu0 %v613
        %812 = vmatpush.xpose.msra.mxu0 %v610
        %813 = vmatpush.xpose.msra.mxu0 %v607
        %814 = vmatpush.xpose.msra.mxu0 %v604
        %815 = vmatpush.xpose.msra.mxu0 %v601
        %816 = vmatpush.xpose.msra.mxu0 %v598
        %817 = vmatpush.xpose.msra.mxu0 %v595
        %818 = vmatpush.xpose.msra.mxu0 %v592
        %819 = vmatpush.xpose.msra.mxu0 %v589
        %820 = vmatpush.xpose.msra.mxu0 %v586
        %821 = vmatpush.xpose.msra.mxu0 %v583
        %822 = vmatpush.xpose.msra.mxu0 %v580
        %823 = vmatpush.xpose.msra.mxu0 %v577
        %824 = vmatpush.xpose.msra.mxu0 %v574
        %825 = vmatpush.xpose.msra.mxu0 %v571
        %826 = vmatpush.xpose.msra.mxu0 %v568
        %827 = vmatmul.f32.gmra.mxu0 %v325
        %v828 = vpop.f32.mrf.mxu0
        %v829 = vadd.f32 %v322, %v828
        %830 = vdwg.mxu0
        %831 = vmatpush.xpose.msra.mxu0 %v661
        %832 = vmatpush.xpose.msra.mxu0 %v658
        %833 = vmatpush.xpose.msra.mxu0 %v655
        %834 = vmatpush.xpose.msra.mxu0 %v652
        %835 = vmatpush.xpose.msra.mxu0 %v649
        %836 = vmatpush.xpose.msra.mxu0 %v646
        %837 = vmatpush.xpose.msra.mxu0 %v643
        %838 = vmatpush.xpose.msra.mxu0 %v640
        %839 = vmatpush.xpose.msra.mxu0 %v637
        %840 = vmatpush.xpose.msra.mxu0 %v634
        %841 = vmatpush.xpose.msra.mxu0 %v631
        %842 = vmatpush.xpose.msra.mxu0 %v628
        %843 = vmatpush.xpose.msra.mxu0 %v625
        %844 = vmatpush.xpose.msra.mxu0 %v622
        %845 = vmatpush.xpose.msra.mxu0 %v619
        %846 = vmatpush.xpose.msra.mxu0 %v616
        %847 = vmatmul.f32.gmra.mxu0 %v325
        %v848 = vpop.f32.mrf.mxu0
        %v849 = vadd.f32 %v322, %v848
        %850 = vdwg.mxu0
        %851 = vmatpush.xpose.msra.mxu0 %v709
        %852 = vmatpush.xpose.msra.mxu0 %v706
        %853 = vmatpush.xpose.msra.mxu0 %v703
        %854 = vmatpush.xpose.msra.mxu0 %v700
        %855 = vmatpush.xpose.msra.mxu0 %v697
        %856 = vmatpush.xpose.msra.mxu0 %v694
        %857 = vmatpush.xpose.msra.mxu0 %v691
        %858 = vmatpush.xpose.msra.mxu0 %v688
        %859 = vmatpush.xpose.msra.mxu0 %v685
        %860 = vmatpush.xpose.msra.mxu0 %v682
        %861 = vmatpush.xpose.msra.mxu0 %v679
        %862 = vmatpush.xpose.msra.mxu0 %v676
        %863 = vmatpush.xpose.msra.mxu0 %v673
        %864 = vmatpush.xpose.msra.mxu0 %v670
        %865 = vmatpush.xpose.msra.mxu0 %v667
        %866 = vmatpush.xpose.msra.mxu0 %v664
        %867 = vmatmul.f32.gmra.mxu0 %v325
        %v868 = vpop.f32.mrf.mxu0
        %v869 = vadd.f32 %v322, %v868
        %870 = vdwg.mxu0
        %v879 = vrot.slane %v749, 7
        %v880 = vrot.slane %v769, 6
        %v881 = vrot.slane %v789, 5
        %v882 = vrot.slane %v809, 4
        %v883 = vrot.slane %v829, 3
        %v884 = vrot.slane %v849, 2
        %v885 = vrot.slane %v869, 1
        %vm886 = vcmask 1040384
        %v887 = vsel %vm886, %v729, %v879
        %vm888 = vcmask 1042434
        %v889 = vsel %vm888, %v880, %v881
        %vm890 = vcmask 1041408
        %v891 = vsel %vm890, %v887, %v889
        %vm892 = vcmask 1044484
        %v893 = vsel %vm892, %v882, %v883
        %vm894 = vcmask 1046534
        %v895 = vsel %vm894, %v884, %v885
        %vm896 = vcmask 1045508
        %v897 = vsel %vm896, %v893, %v895
        %vm898 = vcmask 1043456
        %v899 = vsel %vm898, %v891, %v897
        %901 = vst [vmem:[%s177] sm:$0xff] %v899
        %s902 = sand.u32 %s94, 1
        %s903 = scalar_lea.sflag [#allocation4], %s902
        %s904 = sand.u32 %s94, 1
        %s905 = smul.addr %s904, 8
        %s906 = scalar_lea.vmem [#allocation3], %s905
        // Predicated region
        $region33: #{tpu_custom_call.1} parent=31 // pred_check
          %p907 = pneg %p104
        $region34: #{tpu_custom_call.1} parent=31 // pred_check_branch
          %909 = sbr.rel (%p907) target = $region36
        $region35: #{tpu_custom_call.1} parent=31 // pred_region
          %911 = vsyncadd %s903, 0
          %s912 = smul.addr %s18, 8
          %s913 = scalar_lea.hbm %s3, %s912
          %s915 = sshll.u32 %s906, 4
          %s916 = int_to_ptr.vmem [resolvable:$true] %s915
          %s917 = sshll.u32 %s913, 4
          %s918 = int_to_ptr.hbm [resolvable:$true] %s917
          %920 = dma.vmem_to_hbm [thread:$0]  %s916, 128, %s918, %s903
        $region36: #{tpu_custom_call.1} parent=31 // pred_fallthru
          _
      $region32: #{tpu_custom_call.1} parent=5 // pred_fallthru
        _
      %p921 = scmp.le.s32.totalorder 2, %s13
      // Predicated region
      $region37: #{tpu_custom_call.1} parent=5 // pred_check
        %p922 = pneg %p921
      $region38: #{tpu_custom_call.1} parent=5 // pred_check_branch
        %924 = sbr.rel (%p922) target = $region40
      $region39: #{tpu_custom_call.1} parent=5 // pred_region
        %s925 = ssub.s32 %s13, 2
        // Predicated region
        $region41: #{tpu_custom_call.1} parent=39 // pred_check
          %p926 = pneg %p110
        $region42: #{tpu_custom_call.1} parent=39 // pred_check_branch
          %928 = sbr.rel (%p926) target = $region44
        $region43: #{tpu_custom_call.1} parent=39 // pred_region
          %s929 = sand.u32 %s95, 1
          %s930 = scalar_lea.sflag [#allocation4], %s929
          %s931 = sand.u32 %s95, 1
          %s932 = smul.addr %s931, 8
          %s933 = scalar_lea.vmem [#allocation3], %s932
          %935 = dma.done %s930, 128
        $region44: #{tpu_custom_call.1} parent=39 // pred_fallthru
          _
      $region40: #{tpu_custom_call.1} parent=5 // pred_fallthru
        _
    $region6: #{tpu_custom_call.1} parent=1 // loop_footer
      %s17 = sadd.s32 1, %s13
    $region7: #{tpu_custom_call.1} parent=1 // loop_footer_branch
      %12 = sbr.rel target = $region3
    $region8: #{tpu_custom_call.1} parent=1 // loop_exit
      _
    %936 = vsyncpa [#allocation4], 1
    %s937 = scalar_lea.sflag [#allocation4], 1
    %938 = vsyncpa %s937, 1

</llo_original>
